<compile_context>
chip_gen: v6e
topology: v6e:2x2x1
jax: 0.10.0
libtpu: 0.0.40
codegen_flags: <defaults>
</compile_context>

<pallas_src>
import jax
import jax.numpy as jnp
from jax.experimental import pallas as pl
from jax.experimental.pallas import tpu as pltpu

C1 = 0.01 ** 2
C2 = 0.03 ** 2


def _make_ssim_kernel(H, W):
    L = H * W

    def kernel(x_ref, y_ref, o_ref):
        # x_ref / y_ref / o_ref: (B, H*W) blocks; each row is one flattened image.
        x = x_ref[...]
        y = y_ref[...]
        shape = x.shape

        # Flattened-spatial index (computed once, shared by all 5 pools).
        col = jax.lax.broadcasted_iota(jnp.int32, shape, 1)
        jmod = col % W
        first_col = jmod == 0            # j == 0   -> reflect to j = 1
        last_col = jmod == (W - 1)       # j == W-1 -> reflect to j = W-2
        first_row = col < W              # i == 0   -> reflect to i = 1
        last_row = col >= (L - W)        # i == H-1 -> reflect to i = H-2

        def hsum3(z):
            # Horizontal reflect-padded 3-tap sum inside each length-W segment.
            l = pltpu.roll(z, 1, 1)        # z[p-1] (cyclic)
            r = pltpu.roll(z, L - 1, 1)    # z[p+1] (cyclic)
            left = jnp.where(first_col, r, l)    # j=0  -> z[p+1] (reflect)
            right = jnp.where(last_col, l, r)    # j=W-1-> z[p-1] (reflect)
            return left + z + right

        def vsum3(z):
            # Vertical reflect-padded 3-tap sum (stride W along the lane axis).
            u = pltpu.roll(z, W, 1)        # z[p-W] (cyclic)
            d = pltpu.roll(z, L - W, 1)    # z[p+W] (cyclic)
            up = jnp.where(first_row, d, u)      # i=0   -> z[p+W] (reflect)
            down = jnp.where(last_row, u, d)     # i=H-1 -> z[p-W] (reflect)
            return up + z + down

        def pool3x3(z):
            return vsum3(hsum3(z)) * (1.0 / 9.0)

        mu_x = pool3x3(x)
        mu_y = pool3x3(y)
        sigma_x = pool3x3(x * x) - mu_x * mu_x
        sigma_y = pool3x3(y * y) - mu_y * mu_y
        sigma_xy = pool3x3(x * y) - mu_x * mu_y

        ssim_n = (2.0 * mu_x * mu_y + C1) * (2.0 * sigma_xy + C2)
        ssim_d = (mu_x * mu_x + mu_y * mu_y + C1) * (sigma_x + sigma_y + C2)
        inv_d = pl.reciprocal(ssim_d, approx=False)   # EUP; accurate to ~1 ulp
        out = (1.0 - ssim_n * inv_d) * 0.5
        o_ref[...] = jnp.clip(out, 0.0, 1.0).astype(o_ref.dtype)

    return kernel


def ssim_loss(x, y, *, max_block_images=256):
    """x, y: (N, C, H, W) float32. Returns (N, C, H, W) SSIM loss map."""
    N, C, H, W = x.shape
    NC = N * C
    L = H * W

    # Free (contiguous) reshapes: each image becomes one lane-dense row.
    xf = x.reshape(NC, L).astype(jnp.float32)
    yf = y.reshape(NC, L).astype(jnp.float32)

    # Images per grid step, sized so (~24 live f32 copies of the block:
    # double-buffered inputs/output + kernel intermediates) fits comfortably
    # inside every generation's default scoped VMEM (v5e 16 MiB, v7x 64 MiB
    # physical). Very large images (L >~ 64K) would additionally need spatial
    # tiling, which is out of scope for these shapes.
    budget_bytes = 6 * 1024 * 1024
    B = max(1, budget_bytes // (L * 4 * 24))
    B = min(B, max_block_images, NC)
    if B < NC:
        # Keep sublane-aligned blocks and pad the image axis so B divides it.
        B = max(8, (B // 8) * 8)
        pad = (-NC) % B
        if pad:
            xf = jnp.pad(xf, ((0, pad), (0, 0)))
            yf = jnp.pad(yf, ((0, pad), (0, 0)))
    NCp = xf.shape[0]
    grid = (NCp // B,)

    out = pl.pallas_call(
        _make_ssim_kernel(H, W),
        out_shape=jax.ShapeDtypeStruct((NCp, L), jnp.float32),
        grid_spec=pltpu.PrefetchScalarGridSpec(
            num_scalar_prefetch=0,
            grid=grid,
            in_specs=[
                pl.BlockSpec((B, L), lambda i: (i, 0)),
                pl.BlockSpec((B, L), lambda i: (i, 0)),
            ],
            out_specs=pl.BlockSpec((B, L), lambda i: (i, 0)),
        ),
        compiler_params=pltpu.CompilerParams(
            dimension_semantics=("parallel",),
            vmem_limit_bytes=48 * 1024 * 1024,
        ),
    )(xf, yf)

    return out[:NC].reshape(N, C, H, W)


def _ssim_ref(x, y):
    """Pure-JAX reference identical to the PyTorch module semantics."""
    xp = jnp.pad(x, ((0, 0), (0, 0), (1, 1), (1, 1)), mode="reflect")
    yp = jnp.pad(y, ((0, 0), (0, 0), (1, 1), (1, 1)), mode="reflect")
    H, W = x.shape[-2], x.shape[-1]

    def pool(z):
        acc = jnp.zeros(z.shape[:2] + (H, W), jnp.float32)
        for dy in range(3):
            for dx in range(3):
                acc = acc + z[:, :, dy:dy + H, dx:dx + W]
        return acc / 9.0

    mu_x, mu_y = pool(xp), pool(yp)
    sigma_x = pool(xp * xp) - mu_x ** 2
    sigma_y = pool(yp * yp) - mu_y ** 2
    sigma_xy = pool(xp * yp) - mu_x * mu_y
    n = (2 * mu_x * mu_y + C1) * (2 * sigma_xy + C2)
    d = (mu_x ** 2 + mu_y ** 2 + C1) * (sigma_x + sigma_y + C2)
    return jnp.clip((1 - n / d) / 2, 0.0, 1.0)


if __name__ == "__main__":
    key = jax.random.PRNGKey(0)
    kx, ky = jax.random.split(key)
    N, C, H, W = 2, 4, 16, 16
    x = jax.random.uniform(kx, (N, C, H, W), dtype=jnp.float32)
    y = jax.random.uniform(ky, (N, C, H, W), dtype=jnp.float32)

    out = ssim_loss(x, y)
    out = jax.block_until_ready(out)

    ref = _ssim_ref(x, y)
    assert out.shape == (N, C, H, W)
    assert jnp.allclose(out, ref, atol=1e-5, rtol=1e-5), "mismatch vs reference"
    print("KERNEL_OK")
</pallas_src>

<mosaic_0001>
module attributes {stable_mosaic.version = 11 : i64} {
  func.func @kernel(%arg0: i32, %arg1: memref<8x256xf32, #tpu.memory_space<vmem>>, %arg2: memref<8x256xf32, #tpu.memory_space<vmem>>, %arg3: memref<8x256xf32, #tpu.memory_space<vmem>>) attributes {dimension_semantics = [#tpu.dimension_semantics<parallel>], iteration_bounds = array<i64: 1>, scalar_prefetch = 0 : i64, scratch_operands = 0 : i64, tpu.core_type = #tpu.core_type<tc>, window_params = [{transform_indices = @transform_0, window_bounds = array<i64: 8, 256>}, {transform_indices = @transform_1, window_bounds = array<i64: 8, 256>}, {transform_indices = @transform_2, window_bounds = array<i64: 8, 256>}]} {
    %c0 = arith.constant 0 : index
    %c0_0 = arith.constant 0 : index
    %0 = vector.load %arg1[%c0, %c0_0] : memref<8x256xf32, #tpu.memory_space<vmem>>, vector<8x256xf32>
    %c0_1 = arith.constant 0 : index
    %c0_2 = arith.constant 0 : index
    %1 = vector.load %arg2[%c0_1, %c0_2] : memref<8x256xf32, #tpu.memory_space<vmem>>, vector<8x256xf32>
    %2 = tpu.iota {dimensions = array<i32: 1>} : vector<8x256xi32>
    %c16_i32 = arith.constant 16 : i32
    %c0_i32 = arith.constant 0 : i32
    %3 = arith.cmpi eq, %c16_i32, %c0_i32 : i32
    %c1_i32 = arith.constant 1 : i32
    %4 = arith.select %3, %c1_i32, %c16_i32 : i32
    %5 = vector.broadcast %4 : i32 to vector<8x256xi32>
    %6 = arith.remsi %2, %5 : vector<8x256xi32>
    %c0_i32_3 = arith.constant 0 : i32
    %7 = vector.broadcast %c0_i32_3 : i32 to vector<8x256xi32>
    %8 = arith.cmpi ne, %6, %7 : vector<8x256xi32>
    %c0_i32_4 = arith.constant 0 : i32
    %9 = vector.broadcast %c0_i32_4 : i32 to vector<8x256xi32>
    %10 = arith.cmpi slt, %6, %9 : vector<8x256xi32>
    %c0_i32_5 = arith.constant 0 : i32
    %11 = arith.cmpi slt, %4, %c0_i32_5 : i32
    %12 = vector.broadcast %11 : i1 to vector<8x256xi1>
    %13 = vector.broadcast %12 : vector<8x256xi1> to vector<8x256xi1>
    %14 = arith.xori %10, %13 : vector<8x256xi1>
    %15 = arith.andi %14, %8 : vector<8x256xi1>
    %16 = vector.broadcast %4 : i32 to vector<8x256xi32>
    %17 = arith.addi %6, %16 : vector<8x256xi32>
    %18 = arith.select %15, %17, %6 : vector<8x256xi1>, vector<8x256xi32>
    %c0_i32_6 = arith.constant 0 : i32
    %19 = vector.broadcast %c0_i32_6 : i32 to vector<8x256xi32>
    %20 = arith.cmpi eq, %18, %19 : vector<8x256xi32>
    %c15_i32 = arith.constant 15 : i32
    %21 = vector.broadcast %c15_i32 : i32 to vector<8x256xi32>
    %22 = arith.cmpi eq, %18, %21 : vector<8x256xi32>
    %c16_i32_7 = arith.constant 16 : i32
    %23 = vector.broadcast %c16_i32_7 : i32 to vector<8x256xi32>
    %24 = arith.cmpi slt, %2, %23 : vector<8x256xi32>
    %c240_i32 = arith.constant 240 : i32
    %25 = vector.broadcast %c240_i32 : i32 to vector<8x256xi32>
    %26 = arith.cmpi sge, %2, %25 : vector<8x256xi32>
    %c1_i32_8 = arith.constant 1 : i32
    %27 = tpu.dynamic_rotate %0 by %c1_i32_8 dim 1 : vector<8x256xf32>, i32 -> vector<8x256xf32>
    %c255_i32 = arith.constant 255 : i32
    %28 = tpu.dynamic_rotate %0 by %c255_i32 dim 1 : vector<8x256xf32>, i32 -> vector<8x256xf32>
    %29 = arith.select %20, %28, %27 : vector<8x256xi1>, vector<8x256xf32>
    %30 = arith.select %22, %27, %28 : vector<8x256xi1>, vector<8x256xf32>
    %31 = arith.addf %29, %0 : vector<8x256xf32>
    %32 = arith.addf %31, %30 : vector<8x256xf32>
    %c16_i32_9 = arith.constant 16 : i32
    %33 = tpu.dynamic_rotate %32 by %c16_i32_9 dim 1 : vector<8x256xf32>, i32 -> vector<8x256xf32>
    %c240_i32_10 = arith.constant 240 : i32
    %34 = tpu.dynamic_rotate %32 by %c240_i32_10 dim 1 : vector<8x256xf32>, i32 -> vector<8x256xf32>
    %35 = arith.select %24, %34, %33 : vector<8x256xi1>, vector<8x256xf32>
    %36 = arith.select %26, %33, %34 : vector<8x256xi1>, vector<8x256xf32>
    %37 = arith.addf %35, %32 : vector<8x256xf32>
    %38 = arith.addf %37, %36 : vector<8x256xf32>
    %cst = arith.constant 0.111111112 : f32
    %39 = vector.broadcast %cst : f32 to vector<8x256xf32>
    %40 = arith.mulf %38, %39 : vector<8x256xf32>
    %c1_i32_11 = arith.constant 1 : i32
    %41 = tpu.dynamic_rotate %1 by %c1_i32_11 dim 1 : vector<8x256xf32>, i32 -> vector<8x256xf32>
    %c255_i32_12 = arith.constant 255 : i32
    %42 = tpu.dynamic_rotate %1 by %c255_i32_12 dim 1 : vector<8x256xf32>, i32 -> vector<8x256xf32>
    %43 = arith.select %20, %42, %41 : vector<8x256xi1>, vector<8x256xf32>
    %44 = arith.select %22, %41, %42 : vector<8x256xi1>, vector<8x256xf32>
    %45 = arith.addf %43, %1 : vector<8x256xf32>
    %46 = arith.addf %45, %44 : vector<8x256xf32>
    %c16_i32_13 = arith.constant 16 : i32
    %47 = tpu.dynamic_rotate %46 by %c16_i32_13 dim 1 : vector<8x256xf32>, i32 -> vector<8x256xf32>
    %c240_i32_14 = arith.constant 240 : i32
    %48 = tpu.dynamic_rotate %46 by %c240_i32_14 dim 1 : vector<8x256xf32>, i32 -> vector<8x256xf32>
    %49 = arith.select %24, %48, %47 : vector<8x256xi1>, vector<8x256xf32>
    %50 = arith.select %26, %47, %48 : vector<8x256xi1>, vector<8x256xf32>
    %51 = arith.addf %49, %46 : vector<8x256xf32>
    %52 = arith.addf %51, %50 : vector<8x256xf32>
    %cst_15 = arith.constant 0.111111112 : f32
    %53 = vector.broadcast %cst_15 : f32 to vector<8x256xf32>
    %54 = arith.mulf %52, %53 : vector<8x256xf32>
    %55 = arith.mulf %0, %0 : vector<8x256xf32>
    %c1_i32_16 = arith.constant 1 : i32
    %56 = tpu.dynamic_rotate %55 by %c1_i32_16 dim 1 : vector<8x256xf32>, i32 -> vector<8x256xf32>
    %c255_i32_17 = arith.constant 255 : i32
    %57 = tpu.dynamic_rotate %55 by %c255_i32_17 dim 1 : vector<8x256xf32>, i32 -> vector<8x256xf32>
    %58 = arith.select %20, %57, %56 : vector<8x256xi1>, vector<8x256xf32>
    %59 = arith.select %22, %56, %57 : vector<8x256xi1>, vector<8x256xf32>
    %60 = arith.addf %58, %55 : vector<8x256xf32>
    %61 = arith.addf %60, %59 : vector<8x256xf32>
    %c16_i32_18 = arith.constant 16 : i32
    %62 = tpu.dynamic_rotate %61 by %c16_i32_18 dim 1 : vector<8x256xf32>, i32 -> vector<8x256xf32>
    %c240_i32_19 = arith.constant 240 : i32
    %63 = tpu.dynamic_rotate %61 by %c240_i32_19 dim 1 : vector<8x256xf32>, i32 -> vector<8x256xf32>
    %64 = arith.select %24, %63, %62 : vector<8x256xi1>, vector<8x256xf32>
    %65 = arith.select %26, %62, %63 : vector<8x256xi1>, vector<8x256xf32>
    %66 = arith.addf %64, %61 : vector<8x256xf32>
    %67 = arith.addf %66, %65 : vector<8x256xf32>
    %cst_20 = arith.constant 0.111111112 : f32
    %68 = vector.broadcast %cst_20 : f32 to vector<8x256xf32>
    %69 = arith.mulf %67, %68 : vector<8x256xf32>
    %70 = arith.mulf %40, %40 : vector<8x256xf32>
    %71 = arith.subf %69, %70 : vector<8x256xf32>
    %72 = arith.mulf %1, %1 : vector<8x256xf32>
    %c1_i32_21 = arith.constant 1 : i32
    %73 = tpu.dynamic_rotate %72 by %c1_i32_21 dim 1 : vector<8x256xf32>, i32 -> vector<8x256xf32>
    %c255_i32_22 = arith.constant 255 : i32
    %74 = tpu.dynamic_rotate %72 by %c255_i32_22 dim 1 : vector<8x256xf32>, i32 -> vector<8x256xf32>
    %75 = arith.select %20, %74, %73 : vector<8x256xi1>, vector<8x256xf32>
    %76 = arith.select %22, %73, %74 : vector<8x256xi1>, vector<8x256xf32>
    %77 = arith.addf %75, %72 : vector<8x256xf32>
    %78 = arith.addf %77, %76 : vector<8x256xf32>
    %c16_i32_23 = arith.constant 16 : i32
    %79 = tpu.dynamic_rotate %78 by %c16_i32_23 dim 1 : vector<8x256xf32>, i32 -> vector<8x256xf32>
    %c240_i32_24 = arith.constant 240 : i32
    %80 = tpu.dynamic_rotate %78 by %c240_i32_24 dim 1 : vector<8x256xf32>, i32 -> vector<8x256xf32>
    %81 = arith.select %24, %80, %79 : vector<8x256xi1>, vector<8x256xf32>
    %82 = arith.select %26, %79, %80 : vector<8x256xi1>, vector<8x256xf32>
    %83 = arith.addf %81, %78 : vector<8x256xf32>
    %84 = arith.addf %83, %82 : vector<8x256xf32>
    %cst_25 = arith.constant 0.111111112 : f32
    %85 = vector.broadcast %cst_25 : f32 to vector<8x256xf32>
    %86 = arith.mulf %84, %85 : vector<8x256xf32>
    %87 = arith.mulf %54, %54 : vector<8x256xf32>
    %88 = arith.subf %86, %87 : vector<8x256xf32>
    %89 = arith.mulf %0, %1 : vector<8x256xf32>
    %c1_i32_26 = arith.constant 1 : i32
    %90 = tpu.dynamic_rotate %89 by %c1_i32_26 dim 1 : vector<8x256xf32>, i32 -> vector<8x256xf32>
    %c255_i32_27 = arith.constant 255 : i32
    %91 = tpu.dynamic_rotate %89 by %c255_i32_27 dim 1 : vector<8x256xf32>, i32 -> vector<8x256xf32>
    %92 = arith.select %20, %91, %90 : vector<8x256xi1>, vector<8x256xf32>
    %93 = arith.select %22, %90, %91 : vector<8x256xi1>, vector<8x256xf32>
    %94 = arith.addf %92, %89 : vector<8x256xf32>
    %95 = arith.addf %94, %93 : vector<8x256xf32>
    %c16_i32_28 = arith.constant 16 : i32
    %96 = tpu.dynamic_rotate %95 by %c16_i32_28 dim 1 : vector<8x256xf32>, i32 -> vector<8x256xf32>
    %c240_i32_29 = arith.constant 240 : i32
    %97 = tpu.dynamic_rotate %95 by %c240_i32_29 dim 1 : vector<8x256xf32>, i32 -> vector<8x256xf32>
    %98 = arith.select %24, %97, %96 : vector<8x256xi1>, vector<8x256xf32>
    %99 = arith.select %26, %96, %97 : vector<8x256xi1>, vector<8x256xf32>
    %100 = arith.addf %98, %95 : vector<8x256xf32>
    %101 = arith.addf %100, %99 : vector<8x256xf32>
    %cst_30 = arith.constant 0.111111112 : f32
    %102 = vector.broadcast %cst_30 : f32 to vector<8x256xf32>
    %103 = arith.mulf %101, %102 : vector<8x256xf32>
    %104 = arith.mulf %40, %54 : vector<8x256xf32>
    %105 = arith.subf %103, %104 : vector<8x256xf32>
    %cst_31 = arith.constant 2.000000e+00 : f32
    %106 = vector.broadcast %cst_31 : f32 to vector<8x256xf32>
    %107 = arith.mulf %106, %40 : vector<8x256xf32>
    %108 = arith.mulf %107, %54 : vector<8x256xf32>
    %cst_32 = arith.constant 9.99999974E-5 : f32
    %109 = vector.broadcast %cst_32 : f32 to vector<8x256xf32>
    %110 = arith.addf %108, %109 : vector<8x256xf32>
    %cst_33 = arith.constant 2.000000e+00 : f32
    %111 = vector.broadcast %cst_33 : f32 to vector<8x256xf32>
    %112 = arith.mulf %111, %105 : vector<8x256xf32>
    %cst_34 = arith.constant 8.99999984E-4 : f32
    %113 = vector.broadcast %cst_34 : f32 to vector<8x256xf32>
    %114 = arith.addf %112, %113 : vector<8x256xf32>
    %115 = arith.mulf %110, %114 : vector<8x256xf32>
    %116 = arith.mulf %40, %40 : vector<8x256xf32>
    %117 = arith.mulf %54, %54 : vector<8x256xf32>
    %118 = arith.addf %116, %117 : vector<8x256xf32>
    %cst_35 = arith.constant 9.99999974E-5 : f32
    %119 = vector.broadcast %cst_35 : f32 to vector<8x256xf32>
    %120 = arith.addf %118, %119 : vector<8x256xf32>
    %121 = arith.addf %71, %88 : vector<8x256xf32>
    %cst_36 = arith.constant 8.99999984E-4 : f32
    %122 = vector.broadcast %cst_36 : f32 to vector<8x256xf32>
    %123 = arith.addf %121, %122 : vector<8x256xf32>
    %124 = arith.mulf %120, %123 : vector<8x256xf32>
    %125 = tpu.reciprocal %124 : vector<8x256xf32> -> vector<8x256xf32>
    %126 = arith.mulf %115, %125 : vector<8x256xf32>
    %cst_37 = arith.constant 1.000000e+00 : f32
    %127 = vector.broadcast %cst_37 : f32 to vector<8x256xf32>
    %128 = arith.subf %127, %126 : vector<8x256xf32>
    %cst_38 = arith.constant 5.000000e-01 : f32
    %129 = vector.broadcast %cst_38 : f32 to vector<8x256xf32>
    %130 = arith.mulf %128, %129 : vector<8x256xf32>
    %cst_39 = arith.constant 0.000000e+00 : f32
    %cst_40 = arith.constant 1.000000e+00 : f32
    %131 = vector.broadcast %cst_39 : f32 to vector<8x256xf32>
    %132 = arith.maximumf %131, %130 : vector<8x256xf32>
    %133 = vector.broadcast %cst_40 : f32 to vector<8x256xf32>
    %134 = arith.minimumf %133, %132 : vector<8x256xf32>
    %c0_41 = arith.constant 0 : index
    %c0_42 = arith.constant 0 : index
    %135 = vector.load %arg3[%c0_41, %c0_42] : memref<8x256xf32, #tpu.memory_space<vmem>>, vector<8x256xf32>
    tpu.vector_store %arg3[%c0_41, %c0_42], %134 {strides = array<i32>} : memref<8x256xf32, #tpu.memory_space<vmem>>, vector<8x256xf32>,
    return
  }
  func.func @transform_0(%arg0: i32) -> (i32, i32) {
    %c0_i32 = arith.constant 0 : i32
    %c0_i32_0 = arith.constant 0 : i32
    return %arg0, %c0_i32 : i32, i32
  }
  func.func @transform_1(%arg0: i32) -> (i32, i32) {
    %c0_i32 = arith.constant 0 : i32
    %c0_i32_0 = arith.constant 0 : i32
    return %arg0, %c0_i32 : i32, i32
  }
  func.func @transform_2(%arg0: i32) -> (i32, i32) {
    %c0_i32 = arith.constant 0 : i32
    %c0_i32_0 = arith.constant 0 : i32
    return %arg0, %c0_i32 : i32, i32
  }
}

</mosaic_0001>

<llo_original>
// kernel: tpu_custom_call.1
$region0: #{tpu_custom_call.1}
  #allocation0 [shape = 'u32[]', space=smem, size = 0x4, offset = 0x4, fixed_abs, tag = 'smem constant byte address 0x4 - core index']
  #allocation1 [shape = 'u32[144,128]{1,0:T(1,128)}', space=vmem, size = 0x12000, scoped, tag = 'internal scratch']
  %s0 = inlined_call_operand.hbm [shape: f32[8,256], index: 0, kind: input, shape index: {}]
  %s1 = inlined_call_operand.hbm [shape: f32[8,256], index: 1, kind: input, shape index: {}]
  %s2 = inlined_call_operand.hbm [shape: f32[8,256], index: 2, kind: output, shape index: {}]
  %s3 = sld [smem:[#allocation0]]
  $region26: #{tpu_custom_call.1} parent=0
    _
  %s5 = ssub.s32 1, %s3
  %s6 = scalar_select 0, %s5, %s3
  $region1: #{tpu_custom_call.1} parent=0
    #allocation2 [shape = 'u8[8192]{0}', space=vmem, size = 0x2000, scoped, tag = 'input window, operand 0, single buffered']
    #allocation3 [shape = 's32[1]{0}', space=sflag, size = 0x4, scoped, tag = 'scoped memory for tpu_custom_call.1']
    #allocation4 [shape = 's32[1]{0}', space=sflag, size = 0x4, scoped, tag = 'scoped memory for tpu_custom_call.1']
    #allocation5 [shape = 'u8[8192]{0}', space=vmem, size = 0x2000, scoped, tag = 'input window, operand 1, single buffered']
    #allocation6 [shape = 's32[1]{0}', space=sflag, size = 0x4, scoped, tag = 'scoped memory for tpu_custom_call.1']
    #allocation7 [shape = 'u8[8192]{0}', space=vmem, size = 0x2000, scoped, tag = 'output window, operand 0, single buffered']
    %7 = vsyncpa [#allocation3], 0
    %8 = vsyncpa [#allocation6], 0
    %9 = vsyncpa [#allocation4], 0
    // Predicated region
    $region2: #{tpu_custom_call.1} parent=1 // pred_check
      _
    $region3: #{tpu_custom_call.1} parent=1 // pred_check_branch
      %11 = sbr.rel (0) target = $region5
    $region4: #{tpu_custom_call.1} parent=1 // pred_region
      %s13 = ssub.s32 256, 256
      %14 = vsyncadd [#allocation3], %s13
      %s16 = sshll.u32 [#allocation2], 4
      %s17 = int_to_ptr.vmem [resolvable:$true] %s16
      %19 = dma.hbm_to_vmem [thread:$0]  %s0, 256, %s17, [#allocation3]
    $region5: #{tpu_custom_call.1} parent=1 // pred_fallthru
      _
    // Predicated region
    $region6: #{tpu_custom_call.1} parent=1 // pred_check
      _
    $region7: #{tpu_custom_call.1} parent=1 // pred_check_branch
      %21 = sbr.rel (0) target = $region9
    $region8: #{tpu_custom_call.1} parent=1 // pred_region
      %s23 = ssub.s32 256, 256
      %24 = vsyncadd [#allocation6], %s23
      %s26 = sshll.u32 [#allocation5], 4
      %s27 = int_to_ptr.vmem [resolvable:$true] %s26
      %29 = dma.hbm_to_vmem [thread:$0]  %s1, 256, %s27, [#allocation6]
    $region9: #{tpu_custom_call.1} parent=1 // pred_fallthru
      _
    // Predicated region
    $region10: #{tpu_custom_call.1} parent=1 // pred_check
      _
    $region11: #{tpu_custom_call.1} parent=1 // pred_check_branch
      %31 = sbr.rel (0) target = $region13
    $region12: #{tpu_custom_call.1} parent=1 // pred_region
      %32 = dma.done [#allocation3], 256
    $region13: #{tpu_custom_call.1} parent=1 // pred_fallthru
      _
    // Predicated region
    $region14: #{tpu_custom_call.1} parent=1 // pred_check
      _
    $region15: #{tpu_custom_call.1} parent=1 // pred_check_branch
      %34 = sbr.rel (0) target = $region17
    $region16: #{tpu_custom_call.1} parent=1 // pred_region
      %35 = dma.done [#allocation6], 256
    $region17: #{tpu_custom_call.1} parent=1 // pred_fallthru
      _
    %v36 = vld [vmem:[#allocation2] sm:$0xff]
    %v37 = vld [vmem:[#allocation2 + $0x8] sm:$0xff]
    %v38 = vld [vmem:[#allocation5] sm:$0xff]
    %v39 = vld [vmem:[#allocation5 + $0x8] sm:$0xff]
    %v40 = vlaneseq
    %v41 = vand.u32 %v40, 127
    %v42 = vadd.s32 %v41, 128
    %vm43 = vcmp.lt.s32.totalorder %v41, 0
    %v44 = vsub.s32 0, %v41
    %v45 = vsel %vm43, %v44, %v41
    %v46 = vshrl.u32 %v45, 4
    %v47 = vand.u32 %v45, 15
    %v48 = vsub.s32 0, %v47
    %v49 = vsel %vm43, %v48, %v47
    %vm50 = vcmp.lt.s32.totalorder %v42, 0
    %v51 = vsub.s32 0, %v42
    %v52 = vsel %vm50, %v51, %v42
    %v53 = vshrl.u32 %v52, 4
    %v54 = vand.u32 %v52, 15
    %v55 = vsub.s32 0, %v54
    %v56 = vsel %vm50, %v55, %v54
    %vm57 = vcmp.ne.s32.totalorder %v49, 0
    %vm58 = vcmp.ne.s32.totalorder %v56, 0
    %vm59 = vcmp.lt.s32.totalorder %v49, 0
    %vm60 = vcmp.lt.s32.totalorder %v56, 0
    %vm61 = vmand %vm59, %vm57
    %vm62 = vmand %vm60, %vm58
    %v63 = vadd.s32 %v49, 16
    %v64 = vadd.s32 %v56, 16
    %v65 = vsel %vm61, %v63, %v49
    %v66 = vsel %vm62, %v64, %v56
    %vm67 = vcmp.eq.s32.totalorder %v65, 0
    %vm68 = vcmp.eq.s32.totalorder %v66, 0
    %vm69 = vcmp.eq.s32.totalorder %v65, 15
    %vm70 = vcmp.eq.s32.totalorder %v66, 15
    %vm71 = vcmp.lt.s32.totalorder %v41, 16
    %vm72 = vcmp.lt.s32.totalorder %v42, 16
    %vm73 = vcmp.ge.s32.totalorder %v41, 240
    %vm74 = vcmp.ge.s32.totalorder %v42, 240
    %75 = vrot.lane.b32.xlu0 %v36, 1
    %v76 = vpop.permute.xlu0 %75
    %77 = vrot.lane.b32.xlu0 %v37, 1
    %v78 = vpop.permute.xlu0 %77
    %vm79 = vcmp.lt.s32.totalorder %v41, 1
    %v80 = vsel %vm79, %v76, %v78
    %v81 = vsel %vm79, %v78, %v76
    %82 = vrot.lane.b32.xlu0 %v36, 127
    %v83 = vpop.permute.xlu0 %82
    %84 = vrot.lane.b32.xlu0 %v37, 127
    %v85 = vpop.permute.xlu0 %84
    %vm86 = vcmp.lt.s32.totalorder %v41, 127
    %v87 = vsel %vm86, %v83, %v85
    %v88 = vsel %vm86, %v85, %v83
    %v89 = vsel %vm67, %v87, %v81
    %v90 = vsel %vm68, %v88, %v80
    %v91 = vsel %vm69, %v81, %v87
    %v92 = vsel %vm70, %v80, %v88
    %v93 = vadd.f32 %v89, %v36
    %v94 = vadd.f32 %v90, %v37
    %v95 = vadd.f32 %v93, %v91
    %v96 = vadd.f32 %v94, %v92
    %97 = vrot.lane.b32.xlu0 %v95, 16
    %v98 = vpop.permute.xlu0 %97
    %99 = vrot.lane.b32.xlu0 %v96, 16
    %v100 = vpop.permute.xlu0 %99
    %v101 = vsel %vm71, %v98, %v100
    %v102 = vsel %vm71, %v100, %v98
    %103 = vrot.lane.b32.xlu0 %v95, 112
    %v104 = vpop.permute.xlu0 %103
    %105 = vrot.lane.b32.xlu0 %v96, 112
    %v106 = vpop.permute.xlu0 %105
    %vm107 = vcmp.lt.s32.totalorder %v41, 112
    %v108 = vsel %vm107, %v104, %v106
    %v109 = vsel %vm107, %v106, %v104
    %v110 = vsel %vm71, %v108, %v102
    %v111 = vsel %vm72, %v109, %v101
    %v112 = vsel %vm73, %v102, %v108
    %v113 = vsel %vm74, %v101, %v109
    %v114 = vadd.f32 %v110, %v95
    %v115 = vadd.f32 %v111, %v96
    %v116 = vadd.f32 %v114, %v112
    %v117 = vadd.f32 %v115, %v113
    %v118 = vmul.f32 %v116, 0.11111111
    %v119 = vmul.f32 %v117, 0.11111111
    %120 = vrot.lane.b32.xlu0 %v38, 1
    %v121 = vpop.permute.xlu0 %120
    %122 = vrot.lane.b32.xlu0 %v39, 1
    %v123 = vpop.permute.xlu0 %122
    %v124 = vsel %vm79, %v121, %v123
    %v125 = vsel %vm79, %v123, %v121
    %126 = vrot.lane.b32.xlu0 %v38, 127
    %v127 = vpop.permute.xlu0 %126
    %128 = vrot.lane.b32.xlu0 %v39, 127
    %v129 = vpop.permute.xlu0 %128
    %v130 = vsel %vm86, %v127, %v129
    %v131 = vsel %vm86, %v129, %v127
    %v132 = vsel %vm67, %v130, %v125
    %v133 = vsel %vm68, %v131, %v124
    %v134 = vsel %vm69, %v125, %v130
    %v135 = vsel %vm70, %v124, %v131
    %v136 = vadd.f32 %v132, %v38
    %v137 = vadd.f32 %v133, %v39
    %v138 = vadd.f32 %v136, %v134
    %v139 = vadd.f32 %v137, %v135
    %140 = vrot.lane.b32.xlu0 %v138, 16
    %v141 = vpop.permute.xlu0 %140
    %142 = vrot.lane.b32.xlu0 %v139, 16
    %v143 = vpop.permute.xlu0 %142
    %v144 = vsel %vm71, %v141, %v143
    %v145 = vsel %vm71, %v143, %v141
    %146 = vrot.lane.b32.xlu0 %v138, 112
    %v147 = vpop.permute.xlu0 %146
    %148 = vrot.lane.b32.xlu0 %v139, 112
    %v149 = vpop.permute.xlu0 %148
    %v150 = vsel %vm107, %v147, %v149
    %v151 = vsel %vm107, %v149, %v147
    %v152 = vsel %vm71, %v150, %v145
    %v153 = vsel %vm72, %v151, %v144
    %v154 = vsel %vm73, %v145, %v150
    %v155 = vsel %vm74, %v144, %v151
    %v156 = vadd.f32 %v152, %v138
    %v157 = vadd.f32 %v153, %v139
    %v158 = vadd.f32 %v156, %v154
    %v159 = vadd.f32 %v157, %v155
    %v160 = vmul.f32 %v158, 0.11111111
    %v161 = vmul.f32 %v159, 0.11111111
    %v162 = vmul.f32 %v36, %v36
    %v163 = vmul.f32 %v37, %v37
    %164 = vrot.lane.b32.xlu0 %v162, 1
    %v165 = vpop.permute.xlu0 %164
    %166 = vrot.lane.b32.xlu0 %v163, 1
    %v167 = vpop.permute.xlu0 %166
    %v168 = vsel %vm79, %v165, %v167
    %v169 = vsel %vm79, %v167, %v165
    %170 = vrot.lane.b32.xlu0 %v162, 127
    %v171 = vpop.permute.xlu0 %170
    %172 = vrot.lane.b32.xlu0 %v163, 127
    %v173 = vpop.permute.xlu0 %172
    %v174 = vsel %vm86, %v171, %v173
    %v175 = vsel %vm86, %v173, %v171
    %v176 = vsel %vm67, %v174, %v169
    %v177 = vsel %vm68, %v175, %v168
    %v178 = vsel %vm69, %v169, %v174
    %v179 = vsel %vm70, %v168, %v175
    %v180 = vadd.f32 %v176, %v162
    %v181 = vadd.f32 %v177, %v163
    %v182 = vadd.f32 %v180, %v178
    %v183 = vadd.f32 %v181, %v179
    %184 = vrot.lane.b32.xlu0 %v182, 16
    %v185 = vpop.permute.xlu0 %184
    %186 = vrot.lane.b32.xlu0 %v183, 16
    %v187 = vpop.permute.xlu0 %186
    %v188 = vsel %vm71, %v185, %v187
    %v189 = vsel %vm71, %v187, %v185
    %190 = vrot.lane.b32.xlu0 %v182, 112
    %v191 = vpop.permute.xlu0 %190
    %192 = vrot.lane.b32.xlu0 %v183, 112
    %v193 = vpop.permute.xlu0 %192
    %v194 = vsel %vm107, %v191, %v193
    %v195 = vsel %vm107, %v193, %v191
    %v196 = vsel %vm71, %v194, %v189
    %v197 = vsel %vm72, %v195, %v188
    %v198 = vsel %vm73, %v189, %v194
    %v199 = vsel %vm74, %v188, %v195
    %v200 = vadd.f32 %v196, %v182
    %v201 = vadd.f32 %v197, %v183
    %v202 = vadd.f32 %v200, %v198
    %v203 = vadd.f32 %v201, %v199
    %v204 = vmul.f32 %v202, 0.11111111
    %v205 = vmul.f32 %v203, 0.11111111
    %v206 = vmul.f32 %v118, %v118
    %v207 = vmul.f32 %v119, %v119
    %v208 = vsub.f32 %v204, %v206
    %v209 = vsub.f32 %v205, %v207
    %v210 = vmul.f32 %v38, %v38
    %v211 = vmul.f32 %v39, %v39
    %212 = vrot.lane.b32.xlu0 %v210, 1
    %v213 = vpop.permute.xlu0 %212
    %214 = vrot.lane.b32.xlu0 %v211, 1
    %v215 = vpop.permute.xlu0 %214
    %v216 = vsel %vm79, %v213, %v215
    %v217 = vsel %vm79, %v215, %v213
    %218 = vrot.lane.b32.xlu0 %v210, 127
    %v219 = vpop.permute.xlu0 %218
    %220 = vrot.lane.b32.xlu0 %v211, 127
    %v221 = vpop.permute.xlu0 %220
    %v222 = vsel %vm86, %v219, %v221
    %v223 = vsel %vm86, %v221, %v219
    %v224 = vsel %vm67, %v222, %v217
    %v225 = vsel %vm68, %v223, %v216
    %v226 = vsel %vm69, %v217, %v222
    %v227 = vsel %vm70, %v216, %v223
    %v228 = vadd.f32 %v224, %v210
    %v229 = vadd.f32 %v225, %v211
    %v230 = vadd.f32 %v228, %v226
    %v231 = vadd.f32 %v229, %v227
    %232 = vrot.lane.b32.xlu0 %v230, 16
    %v233 = vpop.permute.xlu0 %232
    %234 = vrot.lane.b32.xlu0 %v231, 16
    %v235 = vpop.permute.xlu0 %234
    %v236 = vsel %vm71, %v233, %v235
    %v237 = vsel %vm71, %v235, %v233
    %238 = vrot.lane.b32.xlu0 %v230, 112
    %v239 = vpop.permute.xlu0 %238
    %240 = vrot.lane.b32.xlu0 %v231, 112
    %v241 = vpop.permute.xlu0 %240
    %v242 = vsel %vm107, %v239, %v241
    %v243 = vsel %vm107, %v241, %v239
    %v244 = vsel %vm71, %v242, %v237
    %v245 = vsel %vm72, %v243, %v236
    %v246 = vsel %vm73, %v237, %v242
    %v247 = vsel %vm74, %v236, %v243
    %v248 = vadd.f32 %v244, %v230
    %v249 = vadd.f32 %v245, %v231
    %v250 = vadd.f32 %v248, %v246
    %v251 = vadd.f32 %v249, %v247
    %v252 = vmul.f32 %v250, 0.11111111
    %v253 = vmul.f32 %v251, 0.11111111
    %v254 = vmul.f32 %v160, %v160
    %v255 = vmul.f32 %v161, %v161
    %v256 = vsub.f32 %v252, %v254
    %v257 = vsub.f32 %v253, %v255
    %v258 = vmul.f32 %v36, %v38
    %v259 = vmul.f32 %v37, %v39
    %260 = vrot.lane.b32.xlu0 %v258, 1
    %v261 = vpop.permute.xlu0 %260
    %262 = vrot.lane.b32.xlu0 %v259, 1
    %v263 = vpop.permute.xlu0 %262
    %v264 = vsel %vm79, %v261, %v263
    %v265 = vsel %vm79, %v263, %v261
    %266 = vrot.lane.b32.xlu0 %v258, 127
    %v267 = vpop.permute.xlu0 %266
    %268 = vrot.lane.b32.xlu0 %v259, 127
    %v269 = vpop.permute.xlu0 %268
    %v270 = vsel %vm86, %v267, %v269
    %v271 = vsel %vm86, %v269, %v267
    %v272 = vsel %vm67, %v270, %v265
    %v273 = vsel %vm68, %v271, %v264
    %v274 = vsel %vm69, %v265, %v270
    %v275 = vsel %vm70, %v264, %v271
    %v276 = vadd.f32 %v272, %v258
    %v277 = vadd.f32 %v273, %v259
    %v278 = vadd.f32 %v276, %v274
    %v279 = vadd.f32 %v277, %v275
    %280 = vrot.lane.b32.xlu0 %v278, 16
    %v281 = vpop.permute.xlu0 %280
    %282 = vrot.lane.b32.xlu0 %v279, 16
    %v283 = vpop.permute.xlu0 %282
    %v284 = vsel %vm71, %v281, %v283
    %v285 = vsel %vm71, %v283, %v281
    %286 = vrot.lane.b32.xlu0 %v278, 112
    %v287 = vpop.permute.xlu0 %286
    %288 = vrot.lane.b32.xlu0 %v279, 112
    %v289 = vpop.permute.xlu0 %288
    %v290 = vsel %vm107, %v287, %v289
    %v291 = vsel %vm107, %v289, %v287
    %v292 = vsel %vm71, %v290, %v285
    %v293 = vsel %vm72, %v291, %v284
    %v294 = vsel %vm73, %v285, %v290
    %v295 = vsel %vm74, %v284, %v291
    %v296 = vadd.f32 %v292, %v278
    %v297 = vadd.f32 %v293, %v279
    %v298 = vadd.f32 %v296, %v294
    %v299 = vadd.f32 %v297, %v295
    %v300 = vmul.f32 %v298, 0.11111111
    %v301 = vmul.f32 %v299, 0.11111111
    %v302 = vmul.f32 %v118, %v160
    %v303 = vmul.f32 %v119, %v161
    %v304 = vsub.f32 %v300, %v302
    %v305 = vsub.f32 %v301, %v303
    %v306 = vmul.f32 %v118, 2.0
    %v307 = vmul.f32 %v119, 2.0
    %v308 = vmul.f32 %v306, %v160
    %v309 = vmul.f32 %v307, %v161
    %v310 = vadd.f32 %v308, 0.0001
    %v311 = vadd.f32 %v309, 0.0001
    %v312 = vmul.f32 %v304, 2.0
    %v313 = vmul.f32 %v305, 2.0
    %v314 = vadd.f32 %v312, 0.0009
    %v315 = vadd.f32 %v313, 0.0009
    %v316 = vmul.f32 %v310, %v314
    %v317 = vmul.f32 %v311, %v315
    %v318 = vadd.f32 %v206, %v254
    %v319 = vadd.f32 %v207, %v255
    %v320 = vadd.f32 %v318, 0.0001
    %v321 = vadd.f32 %v319, 0.0001
    %v322 = vadd.f32 %v208, %v256
    %v323 = vadd.f32 %v209, %v257
    %v324 = vadd.f32 %v322, 0.0009
    %v325 = vadd.f32 %v323, 0.0009
    %v326 = vmul.f32 %v320, %v324
    %v327 = vmul.f32 %v321, %v325
    %v328 = vrcp.pop %v326
    %v329 = vrcp.pop %v327
    %v330 = vmul.f32 %v316, %v328
    %v331 = vmul.f32 %v317, %v329
    %v332 = vsub.f32 1.0, %v330
    %v333 = vsub.f32 1.0, %v331
    %v334 = vmul.f32 %v332, 0.5
    %v335 = vmul.f32 %v333, 0.5
    %v336 = vmax.f32 %v334, 0.0
    %v337 = vmax.f32 %v335, 0.0
    %v338 = vmin.f32 %v336, 1.0
    %v339 = vmin.f32 %v337, 1.0
    %340 = vst [vmem:[#allocation7] sm:$0xff] %v338
    %341 = vst [vmem:[#allocation7 + $0x8] sm:$0xff] %v339
    // Predicated region
    $region18: #{tpu_custom_call.1} parent=1 // pred_check
      _
    $region19: #{tpu_custom_call.1} parent=1 // pred_check_branch
      %343 = sbr.rel (0) target = $region21
    $region20: #{tpu_custom_call.1} parent=1 // pred_region
      %s345 = ssub.s32 256, 256
      %346 = vsyncadd [#allocation4], %s345
      %s348 = sshll.u32 [#allocation7], 4
      %s349 = int_to_ptr.vmem [resolvable:$true] %s348
      %351 = dma.vmem_to_hbm [thread:$0]  %s349, 256, %s2, [#allocation4]
    $region21: #{tpu_custom_call.1} parent=1 // pred_fallthru
      _
    // Predicated region
    $region22: #{tpu_custom_call.1} parent=1 // pred_check
      _
    $region23: #{tpu_custom_call.1} parent=1 // pred_check_branch
      %353 = sbr.rel (0) target = $region25
    $region24: #{tpu_custom_call.1} parent=1 // pred_region
      %354 = dma.done [#allocation4], 256
    $region25: #{tpu_custom_call.1} parent=1 // pred_fallthru
      _
    %355 = vsyncpa [#allocation3], 1
    %356 = vsyncpa [#allocation6], 1
    %357 = vsyncpa [#allocation4], 1

</llo_original>
